<compile_context>
chip_gen: v6e
topology: v6e:2x2x1
jax: 0.10.0
libtpu: 0.0.40
codegen_flags: <defaults>
</compile_context>

<pallas_src>
import functools

import jax
import jax.numpy as jnp
from jax.experimental import pallas as pl
from jax.experimental.pallas import tpu as pltpu


def _round_up(x, m):
    return ((x + m - 1) // m) * m


def _vmem_budget_bytes():
    """~75% of physical VMEM, leaving headroom for compiler scratch."""
    try:
        cap = int(pltpu.get_tpu_info().vmem_capacity_bytes)
    except Exception:
        cap = 64 * 1024 * 1024  # conservative (v7x-sized) fallback
    return cap * 3 // 4


def _choose_tm(n_rows, d, h, in_item, comp_item, row_chunk, budget,
               requested=None):
    """Row-tile size: as large as the VMEM budget allows (<=1024), >=2 steps."""
    # Resident parameters.  Counted double-buffered (worst case for the
    # pipeliner) even though their block index never changes.
    param_bytes = 2 * ((d * h + h * d) * comp_item + (2 * d + h + d) * 4)

    def tile_bytes(t):
        io = 2 * t * d * in_item * 2                 # double-buffered x + out tiles
        c = min(row_chunk, t)
        interm = c * (2 * d * 4 + d * comp_item      # f32 xf + f32 out acc + y
                      + h * 4 + h * comp_item)       # pre-/post-GELU hidden
        return io + 2 * interm                       # 2x headroom for temporaries

    n8 = _round_up(n_rows, 8)
    if requested is not None:
        tm = _round_up(max(8, min(int(requested), n8)), 8)
    else:
        tm = min(1024, n8)
        if n_rows > 8:
            # Keep >= 2 grid steps so the "parallel" axis can shard across the
            # two TensorCores on v7x (and exercise the pipeline elsewhere).
            tm = min(tm, _round_up(pl.cdiv(n_rows, 2), 8))
    while tm > 8 and param_bytes + tile_bytes(tm) > budget:
        tm = _round_up(tm // 2, 8)
    return max(8, tm)


def prenorm_residual_kernel(x_ref, g_ref, b_ref, w1_ref, b1_ref, w2_ref, b2_ref,
                            o_ref, *, eps, compute_dtype, row_chunk,
                            gelu_approximate):
    tm = x_ref.shape[0]
    # Hoist parameter loads / f32 casts out of the chunk loop.
    gamma = g_ref[...].astype(jnp.float32)
    beta = b_ref[...].astype(jnp.float32)
    bias1 = b1_ref[...].astype(jnp.float32)
    bias2 = b2_ref[...].astype(jnp.float32)

    def do_rows(start, nrows):
        rows = pl.ds(start, nrows)
        # ---- LayerNorm over the last dim (stats in f32, as nn.LayerNorm) ----
        xf = x_ref[rows, :].astype(jnp.float32)
        mean = jnp.mean(xf, axis=-1, keepdims=True)
        var = jnp.mean(jnp.square(xf - mean), axis=-1, keepdims=True)
        y = (xf - mean) * jax.lax.rsqrt(var + eps)
        y = (y * gamma + beta).astype(compute_dtype)
        # ---- fn: Linear(D->H) -> GELU -> Linear(H->D), f32 accumulation ----
        hid = jnp.dot(y, w1_ref[...], preferred_element_type=jnp.float32)
        hid = (hid + bias1).astype(compute_dtype)
        # TODO(synk): PyTorch nn.GELU() is exact (erf); the tanh approximation
        # is used by default for guaranteed Mosaic lowering / EUP throughput.
        hid = jax.nn.gelu(hid, approximate=gelu_approximate)
        out = jnp.dot(hid.astype(compute_dtype), w2_ref[...],
                      preferred_element_type=jnp.float32)
        # ---- residual add (xf already live per-chunk; no re-read needed) ----
        o_ref[rows, :] = (out + bias2 + xf).astype(o_ref.dtype)

    chunk = min(row_chunk, tm)
    n_full = tm // chunk
    rem = tm - n_full * chunk
    if n_full >= 2:
        # Unrolled so the LLO scheduler can overlap LN (VPU) / GELU (EUP) of
        # one chunk with the MXU matmuls of its neighbours.
        def body(i, carry):
            do_rows(pl.multiple_of(i * chunk, chunk), chunk)
            return carry
        jax.lax.fori_loop(0, n_full, body, 0, unroll=True)
    else:
        for i in range(n_full):
            do_rows(i * chunk, chunk)
    if rem:
        do_rows(n_full * chunk, rem)


def prenorm_residual(x, gamma, beta, w1, b1, w2, b2, *, eps=1e-5, tm=None,
                     row_chunk=128, compute_dtype=jnp.bfloat16,
                     gelu_approximate=True):
    """PreNormResidual forward: x [B, S, D] -> [B, S, D]."""
    B, S, D = x.shape
    H = w1.shape[1]
    N = B * S
    in_item = jnp.dtype(x.dtype).itemsize
    comp_item = jnp.dtype(compute_dtype).itemsize

    row_chunk = max(8, _round_up(int(row_chunk), 8))
    budget = _vmem_budget_bytes()
    tm = _choose_tm(N, D, H, in_item, comp_item, row_chunk, budget, tm)
    grid = (pl.cdiv(N, tm),)

    x2 = x.reshape(N, D)                      # metadata-only reshape, no HBM pass
    # Weights go through the MXU in compute_dtype (cast once, on the host);
    # LN params / biases stay as given and are up-cast to f32 in the kernel.
    w1c = w1.astype(compute_dtype)
    w2c = w2.astype(compute_dtype)
    gamma2 = gamma.reshape(1, D)
    beta2 = beta.reshape(1, D)
    b1_2 = b1.reshape(1, H)
    b2_2 = b2.reshape(1, D)

    kernel = functools.partial(
        prenorm_residual_kernel, eps=eps, compute_dtype=compute_dtype,
        row_chunk=row_chunk, gelu_approximate=gelu_approximate)

    cost = pl.CostEstimate(
        flops=4 * N * D * H,                       # two row-wise matmuls
        transcendentals=N * H,                     # GELU
        bytes_accessed=2 * N * D * in_item + 2 * D * H * comp_item,
    )

    def param_spec(shape):
        return pl.BlockSpec(shape, lambda i: (0, 0))   # constant block index

    out = pl.pallas_call(
        kernel,
        out_shape=jax.ShapeDtypeStruct((N, D), x.dtype),
        grid_spec=pltpu.PrefetchScalarGridSpec(
            num_scalar_prefetch=0,
            grid=grid,
            in_specs=[
                pl.BlockSpec((tm, D), lambda i: (i, 0)),   # x row tile (pipelined)
                param_spec((1, D)),                        # gamma
                param_spec((1, D)),                        # beta
                param_spec((D, H)),                        # w1
                param_spec((1, H)),                        # b1
                param_spec((H, D)),                        # w2
                param_spec((1, D)),                        # b2
            ],
            out_specs=pl.BlockSpec((tm, D), lambda i: (i, 0)),
        ),
        compiler_params=pltpu.CompilerParams(
            dimension_semantics=("parallel",),   # row axis shards across TCs (v7x)
            vmem_limit_bytes=budget,
        ),
        cost_estimate=cost,
    )(x2, gamma2, beta2, w1c, b1_2, w2c, b2_2)

    return out.reshape(B, S, D)


def reference(x, gamma, beta, w1, b1, w2, b2, eps=1e-5):
    xf = x.astype(jnp.float32)
    mean = jnp.mean(xf, axis=-1, keepdims=True)
    var = jnp.mean((xf - mean) ** 2, axis=-1, keepdims=True)
    y = (xf - mean) * jax.lax.rsqrt(var + eps) * gamma + beta
    h = jax.nn.gelu(y @ w1 + b1)
    return (h @ w2 + b2 + xf).astype(x.dtype)


if __name__ == "__main__":
    # Small but lane-friendly shapes: D and H are multiples of 128; N = 144.
    B, S, D, H = 2, 72, 128, 256
    key = jax.random.PRNGKey(0)
    kx, kg, kb, k1, k2, kb1, kb2 = jax.random.split(key, 7)

    x = jax.random.normal(kx, (B, S, D), dtype=jnp.float32)
    gamma = 1.0 + 0.1 * jax.random.normal(kg, (D,), dtype=jnp.float32)
    beta = 0.05 * jax.random.normal(kb, (D,), dtype=jnp.float32)
    w1 = jax.random.normal(k1, (D, H), dtype=jnp.float32) * 0.02
    b1 = 0.01 * jax.random.normal(kb1, (H,), dtype=jnp.float32)
    w2 = jax.random.normal(k2, (H, D), dtype=jnp.float32) * 0.02
    b2 = 0.01 * jax.random.normal(kb2, (D,), dtype=jnp.float32)

    ref = reference(x, gamma, beta, w1, b1, w2, b2)

    def check(out, tol):
        assert out.shape == x.shape and out.dtype == x.dtype
        err = float(jnp.max(jnp.abs(out.astype(jnp.float32)
                                    - ref.astype(jnp.float32))))
        assert err <= tol, f"max abs err {err} > {tol}"

    # 1) Defaults: auto row tile (72 rows -> 2 grid steps), bf16 MXU operands.
    out = jax.block_until_ready(prenorm_residual(x, gamma, beta, w1, b1, w2, b2))
    check(out, 2e-2)

    # 2) Explicit tile: ragged grid (cdiv(144,64)=3 steps, last block has 16
    #    valid rows), unrolled 16-row sub-chunks (fori_loop path), f32 compute.
    out2 = jax.block_until_ready(
        prenorm_residual(x, gamma, beta, w1, b1, w2, b2,
                         tm=64, row_chunk=16, compute_dtype=jnp.float32))
    check(out2, 2e-2)

    # 3) Remainder sub-chunk path: 72-row tile, 32-row chunks -> 2 full + 8 rem.
    out3 = jax.block_until_ready(
        prenorm_residual(x, gamma, beta, w1, b1, w2, b2, row_chunk=32))
    check(out3, 2e-2)

    print("KERNEL_OK")
</pallas_src>

<mosaic_0001>
module attributes {stable_mosaic.version = 11 : i64} {
  func.func @prenorm_residual_kernel(%arg0: i32, %arg1: memref<72x128xf32, #tpu.memory_space<vmem>>, %arg2: memref<1x128xf32, #tpu.memory_space<vmem>>, %arg3: memref<1x128xf32, #tpu.memory_space<vmem>>, %arg4: memref<128x256xbf16, #tpu.memory_space<vmem>>, %arg5: memref<1x256xf32, #tpu.memory_space<vmem>>, %arg6: memref<256x128xbf16, #tpu.memory_space<vmem>>, %arg7: memref<1x128xf32, #tpu.memory_space<vmem>>, %arg8: memref<72x128xf32, #tpu.memory_space<vmem>>) attributes {dimension_semantics = [#tpu.dimension_semantics<parallel>], iteration_bounds = array<i64: 2>, scalar_prefetch = 0 : i64, scratch_operands = 0 : i64, tpu.core_type = #tpu.core_type<tc>, window_params = [{transform_indices = @transform_0, window_bounds = array<i64: 72, 128>}, {pipeline_mode = #tpu.pipeline_mode<synchronous>, transform_indices = @transform_1, window_bounds = array<i64: 1, 128>}, {pipeline_mode = #tpu.pipeline_mode<synchronous>, transform_indices = @transform_2, window_bounds = array<i64: 1, 128>}, {pipeline_mode = #tpu.pipeline_mode<synchronous>, transform_indices = @transform_3, window_bounds = array<i64: 128, 256>}, {pipeline_mode = #tpu.pipeline_mode<synchronous>, transform_indices = @transform_4, window_bounds = array<i64: 1, 256>}, {pipeline_mode = #tpu.pipeline_mode<synchronous>, transform_indices = @transform_5, window_bounds = array<i64: 256, 128>}, {pipeline_mode = #tpu.pipeline_mode<synchronous>, transform_indices = @transform_6, window_bounds = array<i64: 1, 128>}, {transform_indices = @transform_7, window_bounds = array<i64: 72, 128>}]} {
    %c0 = arith.constant 0 : index
    %c0_0 = arith.constant 0 : index
    %0 = vector.load %arg2[%c0, %c0_0] : memref<1x128xf32, #tpu.memory_space<vmem>>, vector<1x128xf32>
    %c0_1 = arith.constant 0 : index
    %c0_2 = arith.constant 0 : index
    %1 = vector.load %arg3[%c0_1, %c0_2] : memref<1x128xf32, #tpu.memory_space<vmem>>, vector<1x128xf32>
    %c0_3 = arith.constant 0 : index
    %c0_4 = arith.constant 0 : index
    %2 = vector.load %arg5[%c0_3, %c0_4] : memref<1x256xf32, #tpu.memory_space<vmem>>, vector<1x256xf32>
    %c0_5 = arith.constant 0 : index
    %c0_6 = arith.constant 0 : index
    %3 = vector.load %arg7[%c0_5, %c0_6] : memref<1x128xf32, #tpu.memory_space<vmem>>, vector<1x128xf32>
    %c0_7 = arith.constant 0 : index
    %c0_8 = arith.constant 0 : index
    %4 = vector.load %arg1[%c0_7, %c0_8] : memref<72x128xf32, #tpu.memory_space<vmem>>, vector<72x128xf32>
    %cst = arith.constant dense<0.000000e+00> : vector<72xf32>
    %5 = vector.multi_reduction <add>, %4, %cst [1] : vector<72x128xf32> to vector<72xf32>
    %6 = vector.shape_cast %5 : vector<72xf32> to vector<72x1xf32>
    %cst_9 = arith.constant 1.280000e+02 : f32
    %7 = vector.broadcast %cst_9 : f32 to vector<72x1xf32>
    %8 = arith.divf %6, %7 : vector<72x1xf32>
    %9 = vector.broadcast %8 : vector<72x1xf32> to vector<72x128xf32>
    %10 = arith.subf %4, %9 : vector<72x128xf32>
    %11 = arith.mulf %10, %10 : vector<72x128xf32>
    %cst_10 = arith.constant dense<0.000000e+00> : vector<72xf32>
    %12 = vector.multi_reduction <add>, %11, %cst_10 [1] : vector<72x128xf32> to vector<72xf32>
    %13 = vector.shape_cast %12 : vector<72xf32> to vector<72x1xf32>
    %cst_11 = arith.constant 1.280000e+02 : f32
    %14 = vector.broadcast %cst_11 : f32 to vector<72x1xf32>
    %15 = arith.divf %13, %14 : vector<72x1xf32>
    %16 = vector.broadcast %8 : vector<72x1xf32> to vector<72x128xf32>
    %17 = arith.subf %4, %16 : vector<72x128xf32>
    %cst_12 = arith.constant 9.99999974E-6 : f32
    %18 = vector.broadcast %cst_12 : f32 to vector<72x1xf32>
    %19 = arith.addf %15, %18 : vector<72x1xf32>
    %20 = math.rsqrt %19 : vector<72x1xf32>
    %21 = vector.broadcast %20 : vector<72x1xf32> to vector<72x128xf32>
    %22 = arith.mulf %17, %21 : vector<72x128xf32>
    %23 = vector.broadcast %0 : vector<1x128xf32> to vector<72x128xf32>
    %24 = arith.mulf %22, %23 : vector<72x128xf32>
    %25 = vector.broadcast %1 : vector<1x128xf32> to vector<72x128xf32>
    %26 = arith.addf %24, %25 : vector<72x128xf32>
    %27 = arith.truncf %26 : vector<72x128xf32> to vector<72x128xbf16>
    %c0_13 = arith.constant 0 : index
    %c0_14 = arith.constant 0 : index
    %28 = vector.load %arg4[%c0_13, %c0_14] : memref<128x256xbf16, #tpu.memory_space<vmem>>, vector<128x256xbf16>
    %cst_15 = arith.constant dense<0.000000e+00> : vector<72x256xf32>
    %29 = tpu.matmul %27, %28, %cst_15 {dimension_numbers = #tpu.dot_dimension_numbers<[1], [0], [0], [1], [0, 0, 1, 1], [], []>} : vector<72x128xbf16>, vector<128x256xbf16>, vector<72x256xf32> -> vector<72x256xf32>
    %30 = vector.broadcast %2 : vector<1x256xf32> to vector<72x256xf32>
    %31 = arith.addf %29, %30 : vector<72x256xf32>
    %32 = arith.truncf %31 : vector<72x256xf32> to vector<72x256xbf16>
    %33 = arith.mulf %32, %32 : vector<72x256xbf16>
    %34 = arith.mulf %32, %33 : vector<72x256xbf16>
    %cst_16 = arith.constant 4.467770e-02 : bf16
    %35 = vector.broadcast %cst_16 : bf16 to vector<72x256xbf16>
    %36 = arith.mulf %35, %34 : vector<72x256xbf16>
    %37 = arith.addf %32, %36 : vector<72x256xbf16>
    %cst_17 = arith.constant 7.968750e-01 : bf16
    %38 = vector.broadcast %cst_17 : bf16 to vector<72x256xbf16>
    %39 = arith.mulf %38, %37 : vector<72x256xbf16>
    %40 = math.tanh %39 : vector<72x256xbf16>
    %cst_18 = arith.constant 1.000000e+00 : bf16
    %41 = vector.broadcast %cst_18 : bf16 to vector<72x256xbf16>
    %42 = arith.addf %41, %40 : vector<72x256xbf16>
    %cst_19 = arith.constant 5.000000e-01 : bf16
    %43 = vector.broadcast %cst_19 : bf16 to vector<72x256xbf16>
    %44 = arith.mulf %43, %42 : vector<72x256xbf16>
    %45 = arith.mulf %32, %44 : vector<72x256xbf16>
    %c0_20 = arith.constant 0 : index
    %c0_21 = arith.constant 0 : index
    %46 = vector.load %arg6[%c0_20, %c0_21] : memref<256x128xbf16, #tpu.memory_space<vmem>>, vector<256x128xbf16>
    %cst_22 = arith.constant dense<0.000000e+00> : vector<72x128xf32>
    %47 = tpu.matmul %45, %46, %cst_22 {dimension_numbers = #tpu.dot_dimension_numbers<[1], [0], [0], [1], [0, 0, 1, 1], [], []>} : vector<72x256xbf16>, vector<256x128xbf16>, vector<72x128xf32> -> vector<72x128xf32>
    %48 = vector.broadcast %3 : vector<1x128xf32> to vector<72x128xf32>
    %49 = arith.addf %47, %48 : vector<72x128xf32>
    %50 = arith.addf %49, %4 : vector<72x128xf32>
    %c0_23 = arith.constant 0 : index
    %c0_24 = arith.constant 0 : index
    %51 = vector.load %arg8[%c0_23, %c0_24] : memref<72x128xf32, #tpu.memory_space<vmem>>, vector<72x128xf32>
    tpu.vector_store %arg8[%c0_23, %c0_24], %50 {strides = array<i32>} : memref<72x128xf32, #tpu.memory_space<vmem>>, vector<72x128xf32>,
    return
  }
  func.func @transform_0(%arg0: i32) -> (i32, i32) {
    %c0_i32 = arith.constant 0 : i32
    %c0_i32_0 = arith.constant 0 : i32
    return %arg0, %c0_i32 : i32, i32
  }
  func.func @transform_1(%arg0: i32) -> (i32, i32) {
    %c0_i32 = arith.constant 0 : i32
    %c0_i32_0 = arith.constant 0 : i32
    %c0_i32_1 = arith.constant 0 : i32
    return %c0_i32, %c0_i32_0 : i32, i32
  }
  func.func @transform_2(%arg0: i32) -> (i32, i32) {
    %c0_i32 = arith.constant 0 : i32
    %c0_i32_0 = arith.constant 0 : i32
    %c0_i32_1 = arith.constant 0 : i32
    return %c0_i32, %c0_i32_0 : i32, i32
  }
  func.func @transform_3(%arg0: i32) -> (i32, i32) {
    %c0_i32 = arith.constant 0 : i32
    %c0_i32_0 = arith.constant 0 : i32
    %c0_i32_1 = arith.constant 0 : i32
    return %c0_i32, %c0_i32_0 : i32, i32
  }
  func.func @transform_4(%arg0: i32) -> (i32, i32) {
    %c0_i32 = arith.constant 0 : i32
    %c0_i32_0 = arith.constant 0 : i32
    %c0_i32_1 = arith.constant 0 : i32
    return %c0_i32, %c0_i32_0 : i32, i32
  }
  func.func @transform_5(%arg0: i32) -> (i32, i32) {
    %c0_i32 = arith.constant 0 : i32
    %c0_i32_0 = arith.constant 0 : i32
    %c0_i32_1 = arith.constant 0 : i32
    return %c0_i32, %c0_i32_0 : i32, i32
  }
  func.func @transform_6(%arg0: i32) -> (i32, i32) {
    %c0_i32 = arith.constant 0 : i32
    %c0_i32_0 = arith.constant 0 : i32
    %c0_i32_1 = arith.constant 0 : i32
    return %c0_i32, %c0_i32_0 : i32, i32
  }
  func.func @transform_7(%arg0: i32) -> (i32, i32) {
    %c0_i32 = arith.constant 0 : i32
    %c0_i32_0 = arith.constant 0 : i32
    return %arg0, %c0_i32 : i32, i32
  }
}

</mosaic_0001>

<llo_original>
// kernel: tpu_custom_call.1
$region0: #{tpu_custom_call.1}
  #allocation0 [shape = 'u32[]', space=smem, size = 0x4, offset = 0x4, fixed_abs, tag = 'smem constant byte address 0x4 - core index']
  #allocation1 [shape = 'u32[144,128]{1,0:T(1,128)}', space=vmem, size = 0x12000, scoped, tag = 'internal scratch']
  %s0 = inlined_call_operand.hbm [shape: f32[144,128], index: 0, kind: input, shape index: {}]
  %s1 = inlined_call_operand.vmem [shape: f32[1,128], index: 1, kind: input, shape index: {}]
  %s2 = inlined_call_operand.hbm [shape: f32[1,128], index: 2, kind: input, shape index: {}]
  %s3 = inlined_call_operand.hbm [shape: bf16[128,256], index: 3, kind: input, shape index: {}]
  %s4 = inlined_call_operand.vmem [shape: f32[1,256], index: 4, kind: input, shape index: {}]
  %s5 = inlined_call_operand.hbm [shape: bf16[256,128], index: 5, kind: input, shape index: {}]
  %s6 = inlined_call_operand.vmem [shape: f32[1,128], index: 6, kind: input, shape index: {}]
  %s7 = inlined_call_operand.hbm [shape: f32[144,128], index: 7, kind: output, shape index: {}]
  %s8 = sld [smem:[#allocation0]]
  $region77: #{tpu_custom_call.1} parent=0
    _
  %s10 = ssub.s32 1, %s8
  %s11 = scalar_select 0, %s10, %s8
  $region1: #{tpu_custom_call.1} parent=0
    #allocation2 [shape = 'u8[73728]{0}', space=vmem, size = 0x12000, scoped, tag = 'input window, operand 0']
    #allocation3 [shape = 's32[2]{0}', space=sflag, size = 0x8, scoped, tag = 'scoped memory for tpu_custom_call.1']
    #allocation4 [shape = 's32[2]{0}', space=sflag, size = 0x8, scoped, tag = 'scoped memory for tpu_custom_call.1']
    #allocation5 [shape = 'u8[512]{0}', space=vmem, size = 0x400, scoped, tag = 'input window, operand 2, single buffered']
    #allocation6 [shape = 's32[1]{0}', space=sflag, size = 0x4, scoped, tag = 'scoped memory for tpu_custom_call.1']
    #allocation7 [shape = 'u8[65536]{0}', space=vmem, size = 0x10000, scoped, tag = 'input window, operand 3, single buffered']
    #allocation8 [shape = 'u8[65536]{0}', space=vmem, size = 0x10000, scoped, tag = 'input window, operand 5, single buffered']
    #allocation9 [shape = 's32[1]{0}', space=sflag, size = 0x4, scoped, tag = 'scoped memory for tpu_custom_call.1']
    #allocation10 [shape = 'u8[73728]{0}', space=vmem, size = 0x12000, scoped, tag = 'output window, operand 0']
    %12 = vsyncpa [#allocation3], 0
    %s13 = scalar_lea.sflag [#allocation3], 1
    %14 = vsyncpa %s13, 0
    %15 = vsyncpa [#allocation6], 0
    %16 = vsyncpa [#allocation9], 0
    %17 = vsyncpa [#allocation4], 0
    %s18 = scalar_lea.sflag [#allocation4], 1
    %19 = vsyncpa %s18, 0
    loop: start=0, step=1, limit=4
    $region2: #{tpu_custom_call.1} parent=1 // loop_pre_header
      _
    $region3: #{tpu_custom_call.1} parent=1 // loop_header
      %s21 = sphi 0, %s25
      %p22 = scmp.ge.s32.totalorder %s21, 4
      %s31 = sphi 0, %s33
      %s34 = sphi 0, %s31
      %s35 = sphi 0, %s34
      %s51 = sphi 0, %s35
      %s55 = sphi 0, %s55
      %s57 = sphi 0, %s55
      %s58 = sphi 0, %s57
      %s72 = sphi 0, %s58
      %s76 = sphi 0, %s76
      %s78 = sphi 0, %s76
      %s79 = sphi 0, %s78
      %s93 = sphi 0, %s79
      %s97 = sphi 0, %s97
      %s99 = sphi 0, %s97
      %s100 = sphi 0, %s99
      %s114 = sphi 0, %s100
      %s118 = sphi 0, %s118
      %s120 = sphi 0, %s118
      %s121 = sphi 0, %s120
      %s135 = sphi 0, %s121
      %s139 = sphi 0, %s139
      %s141 = sphi 0, %s139
      %s142 = sphi 0, %s141
      %s156 = sphi 0, %s142
      %s160 = sphi 0, %s160
      %s162 = sphi 0, %s160
      %s163 = sphi 0, %s162
      %s177 = sphi 0, %s163
      %s183 = sphi 0, %s185
      %s186 = sphi 0, %s183
      %s187 = sphi 0, %s186
      %s203 = sphi 0, %s187
    $region4: #{tpu_custom_call.1} parent=1 // loop_header_branch
      %24 = sbr.rel (%p22) target = $region8
    $region5: #{tpu_custom_call.1} parent=1 // loop_body
      %s26 = ssub.s32 %s21, 1
      %s27 = ssub.s32 %s21, 2
      %s28 = sadd.s32 %s21, 1
      %s29 = ssub.s32 %s21, %s28
      %p30 = scmp.eq.s32.totalorder %s29, 0
      %s32 = sadd.s32 %s31, 1
      %s33 = scalar_select %p30, %s31, %s32
      %p36 = pneg %p30
      %p37 = scmp.eq.s32.totalorder %s21, 1
      %p38 = por %p36, %p37
      %p39 = scmp.ne.s32.totalorder %s31, %s34
      %p40 = scmp.eq.s32.totalorder %s21, 0
      %p41 = por %p39, %p40
      %p42 = scmp.ne.s32.totalorder %s31, %s34
      %p43 = scmp.eq.s32.totalorder %s26, 1
      %p44 = por %p42, %p43
      %p45 = scmp.ne.s32.totalorder %s34, %s35
      %p46 = scmp.eq.s32.totalorder %s26, 0
      %p47 = por %p45, %p46
      %p48 = scmp.ne.s32.totalorder %s34, %s35
      %p49 = scmp.eq.s32.totalorder %s27, 1
      %p50 = por %p48, %p49
      %p52 = scmp.ne.s32.totalorder %s35, %s51
      %p53 = scmp.eq.s32.totalorder %s27, 0
      %p54 = por %p52, %p53
      %s56 = sadd.s32 %s55, 1
      %p59 = scmp.eq.s32.totalorder %s21, 1
      %p60 = scmp.ne.s32.totalorder %s55, %s57
      %p61 = scmp.eq.s32.totalorder %s21, 0
      %p62 = por %p60, %p61
      %p63 = scmp.ne.s32.totalorder %s55, %s57
      %p64 = scmp.eq.s32.totalorder %s26, 1
      %p65 = por %p63, %p64
      %p66 = scmp.ne.s32.totalorder %s57, %s58
      %p67 = scmp.eq.s32.totalorder %s26, 0
      %p68 = por %p66, %p67
      %p69 = scmp.ne.s32.totalorder %s57, %s58
      %p70 = scmp.eq.s32.totalorder %s27, 1
      %p71 = por %p69, %p70
      %p73 = scmp.ne.s32.totalorder %s58, %s72
      %p74 = scmp.eq.s32.totalorder %s27, 0
      %p75 = por %p73, %p74
      %s77 = sadd.s32 %s76, 1
      %p80 = scmp.eq.s32.totalorder %s21, 1
      %p81 = scmp.ne.s32.totalorder %s76, %s78
      %p82 = scmp.eq.s32.totalorder %s21, 0
      %p83 = por %p81, %p82
      %p84 = scmp.ne.s32.totalorder %s76, %s78
      %p85 = scmp.eq.s32.totalorder %s26, 1
      %p86 = por %p84, %p85
      %p87 = scmp.ne.s32.totalorder %s78, %s79
      %p88 = scmp.eq.s32.totalorder %s26, 0
      %p89 = por %p87, %p88
      %p90 = scmp.ne.s32.totalorder %s78, %s79
      %p91 = scmp.eq.s32.totalorder %s27, 1
      %p92 = por %p90, %p91
      %p94 = scmp.ne.s32.totalorder %s79, %s93
      %p95 = scmp.eq.s32.totalorder %s27, 0
      %p96 = por %p94, %p95
      %s98 = sadd.s32 %s97, 1
      %p101 = scmp.eq.s32.totalorder %s21, 1
      %p102 = scmp.ne.s32.totalorder %s97, %s99
      %p103 = scmp.eq.s32.totalorder %s21, 0
      %p104 = por %p102, %p103
      %p105 = scmp.ne.s32.totalorder %s97, %s99
      %p106 = scmp.eq.s32.totalorder %s26, 1
      %p107 = por %p105, %p106
      %p108 = scmp.ne.s32.totalorder %s99, %s100
      %p109 = scmp.eq.s32.totalorder %s26, 0
      %p110 = por %p108, %p109
      %p111 = scmp.ne.s32.totalorder %s99, %s100
      %p112 = scmp.eq.s32.totalorder %s27, 1
      %p113 = por %p111, %p112
      %p115 = scmp.ne.s32.totalorder %s100, %s114
      %p116 = scmp.eq.s32.totalorder %s27, 0
      %p117 = por %p115, %p116
      %s119 = sadd.s32 %s118, 1
      %p122 = scmp.eq.s32.totalorder %s21, 1
      %p123 = scmp.ne.s32.totalorder %s118, %s120
      %p124 = scmp.eq.s32.totalorder %s21, 0
      %p125 = por %p123, %p124
      %p126 = scmp.ne.s32.totalorder %s118, %s120
      %p127 = scmp.eq.s32.totalorder %s26, 1
      %p128 = por %p126, %p127
      %p129 = scmp.ne.s32.totalorder %s120, %s121
      %p130 = scmp.eq.s32.totalorder %s26, 0
      %p131 = por %p129, %p130
      %p132 = scmp.ne.s32.totalorder %s120, %s121
      %p133 = scmp.eq.s32.totalorder %s27, 1
      %p134 = por %p132, %p133
      %p136 = scmp.ne.s32.totalorder %s121, %s135
      %p137 = scmp.eq.s32.totalorder %s27, 0
      %p138 = por %p136, %p137
      %s140 = sadd.s32 %s139, 1
      %p143 = scmp.eq.s32.totalorder %s21, 1
      %p144 = scmp.ne.s32.totalorder %s139, %s141
      %p145 = scmp.eq.s32.totalorder %s21, 0
      %p146 = por %p144, %p145
      %p147 = scmp.ne.s32.totalorder %s139, %s141
      %p148 = scmp.eq.s32.totalorder %s26, 1
      %p149 = por %p147, %p148
      %p150 = scmp.ne.s32.totalorder %s141, %s142
      %p151 = scmp.eq.s32.totalorder %s26, 0
      %p152 = por %p150, %p151
      %p153 = scmp.ne.s32.totalorder %s141, %s142
      %p154 = scmp.eq.s32.totalorder %s27, 1
      %p155 = por %p153, %p154
      %p157 = scmp.ne.s32.totalorder %s142, %s156
      %p158 = scmp.eq.s32.totalorder %s27, 0
      %p159 = por %p157, %p158
      %s161 = sadd.s32 %s160, 1
      %p164 = scmp.eq.s32.totalorder %s21, 1
      %p165 = scmp.ne.s32.totalorder %s160, %s162
      %p166 = scmp.eq.s32.totalorder %s21, 0
      %p167 = por %p165, %p166
      %p168 = scmp.ne.s32.totalorder %s160, %s162
      %p169 = scmp.eq.s32.totalorder %s26, 1
      %p170 = por %p168, %p169
      %p171 = scmp.ne.s32.totalorder %s162, %s163
      %p172 = scmp.eq.s32.totalorder %s26, 0
      %p173 = por %p171, %p172
      %p174 = scmp.ne.s32.totalorder %s162, %s163
      %p175 = scmp.eq.s32.totalorder %s27, 1
      %p176 = por %p174, %p175
      %p178 = scmp.ne.s32.totalorder %s163, %s177
      %p179 = scmp.eq.s32.totalorder %s27, 0
      %p180 = por %p178, %p179
      %s181 = ssub.s32 %s21, %s28
      %p182 = scmp.eq.s32.totalorder %s181, 0
      %s184 = sadd.s32 %s183, 1
      %s185 = scalar_select %p182, %s183, %s184
      %p188 = pneg %p182
      %p189 = scmp.eq.s32.totalorder %s21, 1
      %p190 = por %p188, %p189
      %p191 = scmp.ne.s32.totalorder %s183, %s186
      %p192 = scmp.eq.s32.totalorder %s21, 0
      %p193 = por %p191, %p192
      %p194 = scmp.ne.s32.totalorder %s183, %s186
      %p195 = scmp.eq.s32.totalorder %s26, 1
      %p196 = por %p194, %p195
      %p197 = scmp.ne.s32.totalorder %s186, %s187
      %p198 = scmp.eq.s32.totalorder %s26, 0
      %p199 = por %p197, %p198
      %p200 = scmp.ne.s32.totalorder %s186, %s187
      %p201 = scmp.eq.s32.totalorder %s27, 1
      %p202 = por %p200, %p201
      %p204 = scmp.ne.s32.totalorder %s187, %s203
      %p205 = scmp.eq.s32.totalorder %s27, 0
      %p206 = por %p204, %p205
      %p207 = scmp.le.s32.totalorder 1, %s21
      %p208 = scmp.lt.s32.totalorder %s21, 3
      %p209 = pnand %p207, %p208
      %p210 = pneg %p209
      // Predicated region
      $region9: #{tpu_custom_call.1} parent=5 // pred_check
        _
      $region10: #{tpu_custom_call.1} parent=5 // pred_check_branch
        %212 = sbr.rel (%p209) target = $region12
      $region11: #{tpu_custom_call.1} parent=5 // pred_region
        %s213 = ssub.s32 %s21, 1
        // Predicated region
        $region13: #{tpu_custom_call.1} parent=11 // pred_check
          %p214 = pneg %p68
        $region14: #{tpu_custom_call.1} parent=11 // pred_check_branch
          %216 = sbr.rel (%p214) target = $region16
        $region15: #{tpu_custom_call.1} parent=11 // pred_region
          _
        $region16: #{tpu_custom_call.1} parent=11 // pred_fallthru
          _
        // Predicated region
        $region17: #{tpu_custom_call.1} parent=11 // pred_check
          %p217 = pneg %p89
        $region18: #{tpu_custom_call.1} parent=11 // pred_check_branch
          %219 = sbr.rel (%p217) target = $region20
        $region19: #{tpu_custom_call.1} parent=11 // pred_region
          %s221 = ssub.s32 16, 16
          %222 = vsyncadd [#allocation6], %s221
          %s224 = sshll.u32 [#allocation5], 4
          %s225 = int_to_ptr.vmem [resolvable:$true] %s224
          %227 = dma.hbm_to_vmem [thread:$0]  %s2, 16, %s225, [#allocation6]
        $region20: #{tpu_custom_call.1} parent=11 // pred_fallthru
          _
        // Predicated region
        $region21: #{tpu_custom_call.1} parent=11 // pred_check
          %p228 = pneg %p110
        $region22: #{tpu_custom_call.1} parent=11 // pred_check_branch
          %230 = sbr.rel (%p228) target = $region24
        $region23: #{tpu_custom_call.1} parent=11 // pred_region
          %s232 = ssub.s32 2048, 2048
          %233 = vsyncadd [#allocation6], %s232
          %s234 = sshll.u32 [#allocation7], 4
          %s235 = int_to_ptr.vmem [resolvable:$true] %s234
          %240 = dma.hbm_to_vmem [thread:$0]  %s3, 2048, %s235, [#allocation6], 128, 128, 8
        $region24: #{tpu_custom_call.1} parent=11 // pred_fallthru
          _
        // Predicated region
        $region25: #{tpu_custom_call.1} parent=11 // pred_check
          %p241 = pneg %p131
        $region26: #{tpu_custom_call.1} parent=11 // pred_check_branch
          %243 = sbr.rel (%p241) target = $region28
        $region27: #{tpu_custom_call.1} parent=11 // pred_region
          _
        $region28: #{tpu_custom_call.1} parent=11 // pred_fallthru
          _
        // Predicated region
        $region29: #{tpu_custom_call.1} parent=11 // pred_check
          %p244 = pneg %p152
        $region30: #{tpu_custom_call.1} parent=11 // pred_check_branch
          %246 = sbr.rel (%p244) target = $region32
        $region31: #{tpu_custom_call.1} parent=11 // pred_region
          %s248 = ssub.s32 2048, 2048
          %249 = vsyncadd [#allocation9], %s248
          %s250 = sshll.u32 [#allocation8], 4
          %s251 = int_to_ptr.vmem [resolvable:$true] %s250
          %256 = dma.hbm_to_vmem [thread:$0]  %s5, 2048, %s251, [#allocation9], 64, 64, 4
        $region32: #{tpu_custom_call.1} parent=11 // pred_fallthru
          _
        // Predicated region
        $region33: #{tpu_custom_call.1} parent=11 // pred_check
          %p257 = pneg %p173
        $region34: #{tpu_custom_call.1} parent=11 // pred_check_branch
          %259 = sbr.rel (%p257) target = $region36
        $region35: #{tpu_custom_call.1} parent=11 // pred_region
          _
        $region36: #{tpu_custom_call.1} parent=11 // pred_fallthru
          _
      $region12: #{tpu_custom_call.1} parent=5 // pred_fallthru
        _
      %p260 = scmp.lt.s32.totalorder %s21, 2
      // Predicated region
      $region37: #{tpu_custom_call.1} parent=5 // pred_check
        %p261 = pneg %p260
      $region38: #{tpu_custom_call.1} parent=5 // pred_check_branch
        %263 = sbr.rel (%p261) target = $region40
      $region39: #{tpu_custom_call.1} parent=5 // pred_region
        // Predicated region
        $region41: #{tpu_custom_call.1} parent=39 // pred_check
          %p264 = pneg %p41
        $region42: #{tpu_custom_call.1} parent=39 // pred_check_branch
          %266 = sbr.rel (%p264) target = $region44
        $region43: #{tpu_custom_call.1} parent=39 // pred_region
          %s267 = sand.u32 %s31, 1
          %s268 = scalar_lea.sflag [#allocation3], %s267
          %s269 = sand.u32 %s31, 1
          %s270 = smul.addr %s269, 72
          %s271 = scalar_lea.vmem [#allocation2], %s270
          %s272 = smul.u32 9, %s21
          %s274 = ssub.s32 1152, 1152
          %275 = vsyncadd %s268, %s274
          %s276 = smul.addr %s272, 128
          %s277 = scalar_lea.hbm %s0, %s276
          %s278 = sshll.u32 %s271, 4
          %s279 = int_to_ptr.vmem [resolvable:$true] %s278
          %284 = dma.hbm_to_vmem [thread:$0]  %s277, 1152, %s279, %s268, 128, 128, 8
        $region44: #{tpu_custom_call.1} parent=39 // pred_fallthru
          _
      $region40: #{tpu_custom_call.1} parent=5 // pred_fallthru
        _
      %p285 = scmp.le.s32.totalorder 1, %s21
      %p286 = scmp.lt.s32.totalorder %s21, 3
      %p287 = pnand %p285, %p286
      %p288 = pneg %p287
      // Predicated region
      $region45: #{tpu_custom_call.1} parent=5 // pred_check
        _
      $region46: #{tpu_custom_call.1} parent=5 // pred_check_branch
        %290 = sbr.rel (%p287) target = $region48
      $region47: #{tpu_custom_call.1} parent=5 // pred_region
        %s291 = ssub.s32 %s21, 1
        %s292 = sand.u32 %s34, 1
        %s293 = scalar_lea.sflag [#allocation3], %s292
        %s294 = sand.u32 %s34, 1
        %s295 = smul.addr %s294, 72
        %s296 = scalar_lea.vmem [#allocation2], %s295
        // Predicated region
        $region49: #{tpu_custom_call.1} parent=47 // pred_check
          %p297 = pneg %p47
        $region50: #{tpu_custom_call.1} parent=47 // pred_check_branch
          %299 = sbr.rel (%p297) target = $region52
        $region51: #{tpu_custom_call.1} parent=47 // pred_region
          %300 = dma.done %s293, 1152
        $region52: #{tpu_custom_call.1} parent=47 // pred_fallthru
          _
        // Predicated region
        $region53: #{tpu_custom_call.1} parent=47 // pred_check
          %p301 = pneg %p89
        $region54: #{tpu_custom_call.1} parent=47 // pred_check_branch
          %303 = sbr.rel (%p301) target = $region56
        $region55: #{tpu_custom_call.1} parent=47 // pred_region
          %304 = dma.done [#allocation6], 16
        $region56: #{tpu_custom_call.1} parent=47 // pred_fallthru
          _
        // Predicated region
        $region57: #{tpu_custom_call.1} parent=47 // pred_check
          %p305 = pneg %p110
        $region58: #{tpu_custom_call.1} parent=47 // pred_check_branch
          %307 = sbr.rel (%p305) target = $region60
        $region59: #{tpu_custom_call.1} parent=47 // pred_region
          %308 = dma.done [#allocation6], 2048
        $region60: #{tpu_custom_call.1} parent=47 // pred_fallthru
          _
        // Predicated region
        $region61: #{tpu_custom_call.1} parent=47 // pred_check
          %p309 = pneg %p152
        $region62: #{tpu_custom_call.1} parent=47 // pred_check_branch
          %311 = sbr.rel (%p309) target = $region64
        $region63: #{tpu_custom_call.1} parent=47 // pred_region
          %312 = dma.done [#allocation9], 2048
        $region64: #{tpu_custom_call.1} parent=47 // pred_fallthru
          _
        %s313 = sand.u32 %s34, 1
        %s314 = scalar_lea.sflag [#allocation3], %s313
        %s315 = sand.u32 %s34, 1
        %s316 = smul.addr %s315, 72
        %s317 = scalar_lea.vmem [#allocation2], %s316
        %p318 = pneg %p47
        %p319 = pneg %p44
        %p320 = pneg %p68
        %p321 = pneg %p65
        %p322 = pneg %p89
        %p323 = pneg %p86
        %p324 = pneg %p110
        %p325 = pneg %p107
        %p326 = pneg %p131
        %p327 = pneg %p128
        %p328 = pneg %p152
        %p329 = pneg %p149
        %p330 = pneg %p173
        %p331 = pneg %p170
        %p332 = pneg %p199
        %p333 = pneg %p196
        %s334 = sand.u32 %s186, 1
        %s335 = scalar_lea.sflag [#allocation4], %s334
        %s336 = sand.u32 %s186, 1
        %s337 = smul.addr %s336, 72
        %s338 = scalar_lea.vmem [#allocation10], %s337
        %s339 = smul.u32 9, %s26
        %s340 = smul.u32 9, %s26
        %v346 = vld [vmem:[%s1] sm:$0x1]
        %v347 = vld [vmem:[#allocation5] sm:$0x1]
        %v348 = vld [vmem:[%s4] sm:$0x3]
        %v349 = vld [vmem:[%s6] sm:$0x1]
        %v350 = vld [vmem:[%s296] sm:$0xff]
        %v351 = vld [vmem:[%s296 + $0x8] sm:$0xff]
        %v352 = vld [vmem:[%s296 + $0x10] sm:$0xff]
        %v353 = vld [vmem:[%s296 + $0x18] sm:$0xff]
        %v354 = vld [vmem:[%s296 + $0x20] sm:$0xff]
        %v355 = vld [vmem:[%s296 + $0x28] sm:$0xff]
        %v356 = vld [vmem:[%s296 + $0x30] sm:$0xff]
        %v357 = vld [vmem:[%s296 + $0x38] sm:$0xff]
        %v358 = vld [vmem:[%s296 + $0x40] sm:$0xff]
        %359 = vadd.xlane.f32.xlu0 %v350
        %v360 = vpop.xlane.xlu0 %359
        %361 = vadd.xlane.f32.xlu0 %v351
        %v362 = vpop.xlane.xlu0 %361
        %363 = vadd.xlane.f32.xlu0 %v352
        %v364 = vpop.xlane.xlu0 %363
        %365 = vadd.xlane.f32.xlu0 %v353
        %v366 = vpop.xlane.xlu0 %365
        %367 = vadd.xlane.f32.xlu0 %v354
        %v368 = vpop.xlane.xlu0 %367
        %369 = vadd.xlane.f32.xlu0 %v355
        %v370 = vpop.xlane.xlu0 %369
        %371 = vadd.xlane.f32.xlu0 %v356
        %v372 = vpop.xlane.xlu0 %371
        %373 = vadd.xlane.f32.xlu0 %v357
        %v374 = vpop.xlane.xlu0 %373
        %375 = vadd.xlane.f32.xlu0 %v358
        %v376 = vpop.xlane.xlu0 %375
        %v377 = vrcp.pop 128.0
        %v378 = vmul.f32 %v360, %v377
        %v379 = vmul.f32 %v362, %v377
        %v380 = vmul.f32 %v364, %v377
        %v381 = vmul.f32 %v366, %v377
        %v382 = vmul.f32 %v368, %v377
        %v383 = vmul.f32 %v370, %v377
        %v384 = vmul.f32 %v372, %v377
        %v385 = vmul.f32 %v374, %v377
        %v386 = vmul.f32 %v376, %v377
        %v387 = vsub.f32 %v350, %v378
        %v388 = vsub.f32 %v351, %v379
        %v389 = vsub.f32 %v352, %v380
        %v390 = vsub.f32 %v353, %v381
        %v391 = vsub.f32 %v354, %v382
        %v392 = vsub.f32 %v355, %v383
        %v393 = vsub.f32 %v356, %v384
        %v394 = vsub.f32 %v357, %v385
        %v395 = vsub.f32 %v358, %v386
        %v396 = vmul.f32 %v387, %v387
        %v397 = vmul.f32 %v388, %v388
        %v398 = vmul.f32 %v389, %v389
        %v399 = vmul.f32 %v390, %v390
        %v400 = vmul.f32 %v391, %v391
        %v401 = vmul.f32 %v392, %v392
        %v402 = vmul.f32 %v393, %v393
        %v403 = vmul.f32 %v394, %v394
        %v404 = vmul.f32 %v395, %v395
        %405 = vadd.xlane.f32.xlu0 %v396
        %v406 = vpop.xlane.xlu0 %405
        %407 = vadd.xlane.f32.xlu0 %v397
        %v408 = vpop.xlane.xlu0 %407
        %409 = vadd.xlane.f32.xlu0 %v398
        %v410 = vpop.xlane.xlu0 %409
        %411 = vadd.xlane.f32.xlu0 %v399
        %v412 = vpop.xlane.xlu0 %411
        %413 = vadd.xlane.f32.xlu0 %v400
        %v414 = vpop.xlane.xlu0 %413
        %415 = vadd.xlane.f32.xlu0 %v401
        %v416 = vpop.xlane.xlu0 %415
        %417 = vadd.xlane.f32.xlu0 %v402
        %v418 = vpop.xlane.xlu0 %417
        %419 = vadd.xlane.f32.xlu0 %v403
        %v420 = vpop.xlane.xlu0 %419
        %421 = vadd.xlane.f32.xlu0 %v404
        %v422 = vpop.xlane.xlu0 %421
        %v423 = vmul.f32 %v406, %v377
        %v424 = vmul.f32 %v408, %v377
        %v425 = vmul.f32 %v410, %v377
        %v426 = vmul.f32 %v412, %v377
        %v427 = vmul.f32 %v414, %v377
        %v428 = vmul.f32 %v416, %v377
        %v429 = vmul.f32 %v418, %v377
        %v430 = vmul.f32 %v420, %v377
        %v431 = vmul.f32 %v422, %v377
        %v432 = vadd.f32 %v423, 1e-05
        %v433 = vadd.f32 %v424, 1e-05
        %v434 = vadd.f32 %v425, 1e-05
        %v435 = vadd.f32 %v426, 1e-05
        %v436 = vadd.f32 %v427, 1e-05
        %v437 = vadd.f32 %v428, 1e-05
        %v438 = vadd.f32 %v429, 1e-05
        %v439 = vadd.f32 %v430, 1e-05
        %v440 = vadd.f32 %v431, 1e-05
        %v441 = vrsqrt.pop %v432
        %v442 = vrsqrt.pop %v433
        %v443 = vrsqrt.pop %v434
        %v444 = vrsqrt.pop %v435
        %v445 = vrsqrt.pop %v436
        %v446 = vrsqrt.pop %v437
        %v447 = vrsqrt.pop %v438
        %v448 = vrsqrt.pop %v439
        %v449 = vrsqrt.pop %v440
        %v450 = vmul.f32 %v387, %v441
        %v451 = vmul.f32 %v388, %v442
        %v452 = vmul.f32 %v389, %v443
        %v453 = vmul.f32 %v390, %v444
        %v454 = vmul.f32 %v391, %v445
        %v455 = vmul.f32 %v392, %v446
        %v456 = vmul.f32 %v393, %v447
        %v457 = vmul.f32 %v394, %v448
        %v458 = vmul.f32 %v395, %v449
        %v460 = vlaneseq
        %v461 = vshrl.u32 %v460, 7
        %v462 = vsub.s32 0, %v461
        %v463 = vrot.slane %v346, %v462
        %v465 = vmul.f32 %v450, %v463
        %v466 = vmul.f32 %v451, %v463
        %v467 = vmul.f32 %v452, %v463
        %v468 = vmul.f32 %v453, %v463
        %v469 = vmul.f32 %v454, %v463
        %v470 = vmul.f32 %v455, %v463
        %v471 = vmul.f32 %v456, %v463
        %v472 = vmul.f32 %v457, %v463
        %v473 = vmul.f32 %v458, %v463
        %v475 = vlaneseq
        %v476 = vshrl.u32 %v475, 7
        %v477 = vsub.s32 0, %v476
        %v478 = vrot.slane %v347, %v477
        %v480 = vadd.f32 %v465, %v478
        %v481 = vadd.f32 %v466, %v478
        %v482 = vadd.f32 %v467, %v478
        %v483 = vadd.f32 %v468, %v478
        %v484 = vadd.f32 %v469, %v478
        %v485 = vadd.f32 %v470, %v478
        %v486 = vadd.f32 %v471, %v478
        %v487 = vadd.f32 %v472, %v478
        %v488 = vadd.f32 %v473, %v478
        %v489 = vpack.c.bf16 %v481, %v480
        %v490 = vpack.c.bf16 %v483, %v482
        %v491 = vpack.c.bf16 %v485, %v484
        %v492 = vpack.c.bf16 %v487, %v486
        %v493 = vpack.c.bf16 %v488, %v488
        %v494 = vld [vmem:[#allocation7] sm:$0xff]
        %v495 = vld [vmem:[#allocation7 + $0x8] sm:$0xff]
        %v496 = vld [vmem:[#allocation7 + $0x10] sm:$0xff]
        %v497 = vld [vmem:[#allocation7 + $0x18] sm:$0xff]
        %v498 = vld [vmem:[#allocation7 + $0x20] sm:$0xff]
        %v499 = vld [vmem:[#allocation7 + $0x28] sm:$0xff]
        %v500 = vld [vmem:[#allocation7 + $0x30] sm:$0xff]
        %v501 = vld [vmem:[#allocation7 + $0x38] sm:$0xff]
        %v502 = vld [vmem:[#allocation7 + $0x40] sm:$0xff]
        %v503 = vld [vmem:[#allocation7 + $0x48] sm:$0xff]
        %v504 = vld [vmem:[#allocation7 + $0x50] sm:$0xff]
        %v505 = vld [vmem:[#allocation7 + $0x58] sm:$0xff]
        %v506 = vld [vmem:[#allocation7 + $0x60] sm:$0xff]
        %v507 = vld [vmem:[#allocation7 + $0x68] sm:$0xff]
        %v508 = vld [vmem:[#allocation7 + $0x70] sm:$0xff]
        %v509 = vld [vmem:[#allocation7 + $0x78] sm:$0xff]
        %v511 = vlaneseq
        %v512 = vshrl.u32 %v511, 7
        %v513 = vsub.s32 0, %v512
        %v514 = vrot.slane %v348, %v513
        %v515 = vlaneseq
        %v516 = vshrl.u32 %v515, 7
        %v517 = vsub.s32 1, %v516
        %v518 = vrot.slane %v348, %v517
        %v537 = vunpack.c.l.b16 %v494
        %v538 = vunpack.c.h.b16 %v494
        %v539 = vunpack.c.l.b16 %v495
        %v540 = vunpack.c.h.b16 %v495
        %v541 = vunpack.c.l.b16 %v496
        %v542 = vunpack.c.h.b16 %v496
        %v543 = vunpack.c.l.b16 %v497
        %v544 = vunpack.c.h.b16 %v497
        %v545 = vunpack.c.l.b16 %v498
        %v546 = vunpack.c.h.b16 %v498
        %v547 = vunpack.c.l.b16 %v499
        %v548 = vunpack.c.h.b16 %v499
        %v549 = vunpack.c.l.b16 %v500
        %v550 = vunpack.c.h.b16 %v500
        %v551 = vunpack.c.l.b16 %v501
        %v552 = vunpack.c.h.b16 %v501
        %v553 = vunpack.c.l.b16 %v502
        %v554 = vunpack.c.h.b16 %v502
        %v555 = vunpack.c.l.b16 %v503
        %v556 = vunpack.c.h.b16 %v503
        %v557 = vunpack.c.l.b16 %v504
        %v558 = vunpack.c.h.b16 %v504
        %v559 = vunpack.c.l.b16 %v505
        %v560 = vunpack.c.h.b16 %v505
        %v561 = vunpack.c.l.b16 %v506
        %v562 = vunpack.c.h.b16 %v506
        %v563 = vunpack.c.l.b16 %v507
        %v564 = vunpack.c.h.b16 %v507
        %v565 = vunpack.c.l.b16 %v508
        %v566 = vunpack.c.h.b16 %v508
        %v567 = vunpack.c.l.b16 %v509
        %v568 = vunpack.c.h.b16 %v509
        %v569 = vpack.c.b16 %v539, %v537
        %v570 = vpack.c.b16 %v540, %v538
        %v571 = vpack.c.b16 %v543, %v541
        %v572 = vpack.c.b16 %v544, %v542
        %v573 = vpack.c.b16 %v547, %v545
        %v574 = vpack.c.b16 %v548, %v546
        %v575 = vpack.c.b16 %v551, %v549
        %v576 = vpack.c.b16 %v552, %v550
        %v577 = vpack.c.b16 %v555, %v553
        %v578 = vpack.c.b16 %v556, %v554
        %v579 = vpack.c.b16 %v559, %v557
        %v580 = vpack.c.b16 %v560, %v558
        %v581 = vpack.c.b16 %v563, %v561
        %v582 = vpack.c.b16 %v564, %v562
        %v583 = vpack.c.b16 %v567, %v565
        %v584 = vpack.c.b16 %v568, %v566
        %601 = vmatprep.subr.bf16.mxu0 %v584
        %602 = vmatpush1.bf16.msra.mxu0 %v583
        %603 = vmatprep.subr.bf16.mxu0 %v582
        %604 = vmatpush1.bf16.msra.mxu0 %v581
        %605 = vmatprep.subr.bf16.mxu0 %v580
        %606 = vmatpush1.bf16.msra.mxu0 %v579
        %607 = vmatprep.subr.bf16.mxu0 %v578
        %608 = vmatpush1.bf16.msra.mxu0 %v577
        %609 = vmatprep.subr.bf16.mxu0 %v576
        %610 = vmatpush1.bf16.msra.mxu0 %v575
        %611 = vmatprep.subr.bf16.mxu0 %v574
        %612 = vmatpush1.bf16.msra.mxu0 %v573
        %613 = vmatprep.subr.bf16.mxu0 %v572
        %614 = vmatpush1.bf16.msra.mxu0 %v571
        %615 = vmatprep.subr.bf16.mxu0 %v570
        %616 = vmatpush1.bf16.msra.mxu0 %v569
        %617 = vmatprep.subr.bf16.mxu0 0
        %618 = vmatpush2.bf16.msra.mxu0 0
        %619 = vmatprep.subr.bf16.mxu0 0
        %620 = vmatpush2.bf16.msra.mxu0 0
        %621 = vmatprep.subr.bf16.mxu0 0
        %622 = vmatpush2.bf16.msra.mxu0 0
        %623 = vmatprep.subr.bf16.mxu0 0
        %624 = vmatpush2.bf16.msra.mxu0 0
        %625 = vmatprep.subr.bf16.mxu0 0
        %626 = vmatpush2.bf16.msra.mxu0 0
        %627 = vmatprep.subr.bf16.mxu0 0
        %628 = vmatpush2.bf16.msra.mxu0 0
        %629 = vmatprep.subr.bf16.mxu0 0
        %630 = vmatpush2.bf16.msra.mxu0 0
        %631 = vmatprep.subr.bf16.mxu0 0
        %632 = vmatpush2.bf16.msra.mxu0 0
        %633 = vmatprep.mubr.bf16.mxu0 0
        %634 = vmatmul.mubr.bf16.gmra.mxu0 %v489
        %v635 = vpop.f32.mrf.mxu0
        %v636 = vadd.f32 %v514, %v635
        %v637 = vpop.f32.mrf.mxu0
        %v638 = vadd.f32 %v518, %v637
        %v639 = vpop.f32.mrf.mxu0
        %v640 = vadd.f32 %v514, %v639
        %v641 = vpop.f32.mrf.mxu0
        %v642 = vadd.f32 %v518, %v641
        %643 = vmatprep.mubr.bf16.mxu0 0
        %644 = vmatmul.mubr.bf16.gmra.mxu0 %v490
        %v645 = vpop.f32.mrf.mxu0
        %v646 = vadd.f32 %v514, %v645
        %v647 = vpop.f32.mrf.mxu0
        %v648 = vadd.f32 %v518, %v647
        %v649 = vpop.f32.mrf.mxu0
        %v650 = vadd.f32 %v514, %v649
        %v651 = vpop.f32.mrf.mxu0
        %v652 = vadd.f32 %v518, %v651
        %653 = vmatprep.mubr.bf16.mxu0 0
        %654 = vmatmul.mubr.bf16.gmra.mxu0 %v491
        %v655 = vpop.f32.mrf.mxu0
        %v656 = vadd.f32 %v514, %v655
        %v657 = vpop.f32.mrf.mxu0
        %v658 = vadd.f32 %v518, %v657
        %v659 = vpop.f32.mrf.mxu0
        %v660 = vadd.f32 %v514, %v659
        %v661 = vpop.f32.mrf.mxu0
        %v662 = vadd.f32 %v518, %v661
        %663 = vmatprep.mubr.bf16.mxu0 0
        %664 = vmatmul.mubr.bf16.gmra.mxu0 %v492
        %v665 = vpop.f32.mrf.mxu0
        %v666 = vadd.f32 %v514, %v665
        %v667 = vpop.f32.mrf.mxu0
        %v668 = vadd.f32 %v518, %v667
        %v669 = vpop.f32.mrf.mxu0
        %v670 = vadd.f32 %v514, %v669
        %v671 = vpop.f32.mrf.mxu0
        %v672 = vadd.f32 %v518, %v671
        %673 = vmatprep.mubr.bf16.mxu0 0
        %674 = vmatmul.mubr.bf16.gmra.mxu0 %v493
        %v675 = vpop.f32.mrf.mxu0
        %v676 = vadd.f32 %v514, %v675
        %v677 = vpop.f32.mrf.mxu0
        %v678 = vadd.f32 %v518, %v677
        %v679 = vpop.f32.mrf.mxu0
        %v680 = vpop.f32.mrf.mxu0
        %681 = vdwg.mxu0
        %v682 = vpack.c.bf16 %v640, %v636
        %v683 = vpack.c.bf16 %v642, %v638
        %v684 = vpack.c.bf16 %v650, %v646
        %v685 = vpack.c.bf16 %v652, %v648
        %v686 = vpack.c.bf16 %v660, %v656
        %v687 = vpack.c.bf16 %v662, %v658
        %v688 = vpack.c.bf16 %v670, %v666
        %v689 = vpack.c.bf16 %v672, %v668
        %v690 = vpack.c.bf16 %v676, %v676
        %v691 = vpack.c.bf16 %v678, %v678
        %v692 = vmul.bf16 %v682, %v682
        %v693 = vmul.bf16 %v683, %v683
        %v694 = vmul.bf16 %v684, %v684
        %v695 = vmul.bf16 %v685, %v685
        %v696 = vmul.bf16 %v686, %v686
        %v697 = vmul.bf16 %v687, %v687
        %v698 = vmul.bf16 %v688, %v688
        %v699 = vmul.bf16 %v689, %v689
        %v700 = vmul.bf16 %v690, %v690
        %v701 = vmul.bf16 %v691, %v691
        %v702 = vmul.bf16 %v682, %v692
        %v703 = vmul.bf16 %v683, %v693
        %v704 = vmul.bf16 %v684, %v694
        %v705 = vmul.bf16 %v685, %v695
        %v706 = vmul.bf16 %v686, %v696
        %v707 = vmul.bf16 %v687, %v697
        %v708 = vmul.bf16 %v688, %v698
        %v709 = vmul.bf16 %v689, %v699
        %v710 = vmul.bf16 %v690, %v700
        %v711 = vmul.bf16 %v691, %v701
        %v712 = vmul.bf16 %v702, 1027030327
        %v713 = vmul.bf16 %v703, 1027030327
        %v714 = vmul.bf16 %v704, 1027030327
        %v715 = vmul.bf16 %v705, 1027030327
        %v716 = vmul.bf16 %v706, 1027030327
        %v717 = vmul.bf16 %v707, 1027030327
        %v718 = vmul.bf16 %v708, 1027030327
        %v719 = vmul.bf16 %v709, 1027030327
        %v720 = vmul.bf16 %v710, 1027030327
        %v721 = vmul.bf16 %v711, 1027030327
        %v722 = vadd.bf16 %v682, %v712
        %v723 = vadd.bf16 %v683, %v713
        %v724 = vadd.bf16 %v684, %v714
        %v725 = vadd.bf16 %v685, %v715
        %v726 = vadd.bf16 %v686, %v716
        %v727 = vadd.bf16 %v687, %v717
        %v728 = vadd.bf16 %v688, %v718
        %v729 = vadd.bf16 %v689, %v719
        %v730 = vadd.bf16 %v690, %v720
        %v731 = vadd.bf16 %v691, %v721
        %v732 = vmul.bf16 %v722, 1061961548
        %v733 = vmul.bf16 %v723, 1061961548
        %v734 = vmul.bf16 %v724, 1061961548
        %v735 = vmul.bf16 %v725, 1061961548
        %v736 = vmul.bf16 %v726, 1061961548
        %v737 = vmul.bf16 %v727, 1061961548
        %v738 = vmul.bf16 %v728, 1061961548
        %v739 = vmul.bf16 %v729, 1061961548
        %v740 = vmul.bf16 %v730, 1061961548
        %v741 = vmul.bf16 %v731, 1061961548
        %v742 = vtanh.bf16.pop %v732
        %v743 = vtanh.bf16.pop %v733
        %v744 = vtanh.bf16.pop %v734
        %v745 = vtanh.bf16.pop %v735
        %v746 = vtanh.bf16.pop %v736
        %v747 = vtanh.bf16.pop %v737
        %v748 = vtanh.bf16.pop %v738
        %v749 = vtanh.bf16.pop %v739
        %v750 = vtanh.bf16.pop %v740
        %v751 = vtanh.bf16.pop %v741
        %v752 = vadd.bf16 %v742, 1065369472
        %v753 = vadd.bf16 %v743, 1065369472
        %v754 = vadd.bf16 %v744, 1065369472
        %v755 = vadd.bf16 %v745, 1065369472
        %v756 = vadd.bf16 %v746, 1065369472
        %v757 = vadd.bf16 %v747, 1065369472
        %v758 = vadd.bf16 %v748, 1065369472
        %v759 = vadd.bf16 %v749, 1065369472
        %v760 = vadd.bf16 %v750, 1065369472
        %v761 = vadd.bf16 %v751, 1065369472
        %v762 = vmul.bf16 %v752, 1056980736
        %v763 = vmul.bf16 %v753, 1056980736
        %v764 = vmul.bf16 %v754, 1056980736
        %v765 = vmul.bf16 %v755, 1056980736
        %v766 = vmul.bf16 %v756, 1056980736
        %v767 = vmul.bf16 %v757, 1056980736
        %v768 = vmul.bf16 %v758, 1056980736
        %v769 = vmul.bf16 %v759, 1056980736
        %v770 = vmul.bf16 %v760, 1056980736
        %v771 = vmul.bf16 %v761, 1056980736
        %v772 = vmul.bf16 %v682, %v762
        %v773 = vmul.bf16 %v683, %v763
        %v774 = vmul.bf16 %v684, %v764
        %v775 = vmul.bf16 %v685, %v765
        %v776 = vmul.bf16 %v686, %v766
        %v777 = vmul.bf16 %v687, %v767
        %v778 = vmul.bf16 %v688, %v768
        %v779 = vmul.bf16 %v689, %v769
        %v780 = vmul.bf16 %v690, %v770
        %v781 = vmul.bf16 %v691, %v771
        %v782 = vld [vmem:[#allocation8] sm:$0xf]
        %v783 = vld [vmem:[#allocation8 + $0x4] sm:$0xf]
        %v784 = vld [vmem:[#allocation8 + $0x8] sm:$0xf]
        %v785 = vld [vmem:[#allocation8 + $0xc] sm:$0xf]
        %v786 = vld [vmem:[#allocation8 + $0x10] sm:$0xf]
        %v787 = vld [vmem:[#allocation8 + $0x14] sm:$0xf]
        %v788 = vld [vmem:[#allocation8 + $0x18] sm:$0xf]
        %v789 = vld [vmem:[#allocation8 + $0x1c] sm:$0xf]
        %v790 = vld [vmem:[#allocation8 + $0x20] sm:$0xf]
        %v791 = vld [vmem:[#allocation8 + $0x24] sm:$0xf]
        %v792 = vld [vmem:[#allocation8 + $0x28] sm:$0xf]
        %v793 = vld [vmem:[#allocation8 + $0x2c] sm:$0xf]
        %v794 = vld [vmem:[#allocation8 + $0x30] sm:$0xf]
        %v795 = vld [vmem:[#allocation8 + $0x34] sm:$0xf]
        %v796 = vld [vmem:[#allocation8 + $0x38] sm:$0xf]
        %v797 = vld [vmem:[#allocation8 + $0x3c] sm:$0xf]
        %v798 = vld [vmem:[#allocation8 + $0x40] sm:$0xf]
        %v799 = vld [vmem:[#allocation8 + $0x44] sm:$0xf]
        %v800 = vld [vmem:[#allocation8 + $0x48] sm:$0xf]
        %v801 = vld [vmem:[#allocation8 + $0x4c] sm:$0xf]
        %v802 = vld [vmem:[#allocation8 + $0x50] sm:$0xf]
        %v803 = vld [vmem:[#allocation8 + $0x54] sm:$0xf]
        %v804 = vld [vmem:[#allocation8 + $0x58] sm:$0xf]
        %v805 = vld [vmem:[#allocation8 + $0x5c] sm:$0xf]
        %v806 = vld [vmem:[#allocation8 + $0x60] sm:$0xf]
        %v807 = vld [vmem:[#allocation8 + $0x64] sm:$0xf]
        %v808 = vld [vmem:[#allocation8 + $0x68] sm:$0xf]
        %v809 = vld [vmem:[#allocation8 + $0x6c] sm:$0xf]
        %v810 = vld [vmem:[#allocation8 + $0x70] sm:$0xf]
        %v811 = vld [vmem:[#allocation8 + $0x74] sm:$0xf]
        %v812 = vld [vmem:[#allocation8 + $0x78] sm:$0xf]
        %v813 = vld [vmem:[#allocation8 + $0x7c] sm:$0xf]
        %v815 = vlaneseq
        %v816 = vshrl.u32 %v815, 7
        %v817 = vsub.s32 0, %v816
        %v818 = vrot.slane %v349, %v817
        %v852 = vunpack.c.l.b16 %v782
        %v853 = vunpack.c.l.b16 %v783
        %v854 = vunpack.c.l.b16 %v784
        %v855 = vunpack.c.l.b16 %v785
        %v856 = vunpack.c.l.b16 %v786
        %v857 = vunpack.c.l.b16 %v787
        %v858 = vunpack.c.l.b16 %v788
        %v859 = vunpack.c.l.b16 %v789
        %v860 = vunpack.c.l.b16 %v790
        %v861 = vunpack.c.l.b16 %v791
        %v862 = vunpack.c.l.b16 %v792
        %v863 = vunpack.c.l.b16 %v793
        %v864 = vunpack.c.l.b16 %v794
        %v865 = vunpack.c.l.b16 %v795
        %v866 = vunpack.c.l.b16 %v796
        %v867 = vunpack.c.l.b16 %v797
        %v868 = vunpack.c.l.b16 %v798
        %v869 = vunpack.c.l.b16 %v799
        %v870 = vunpack.c.l.b16 %v800
        %v871 = vunpack.c.l.b16 %v801
        %v872 = vunpack.c.l.b16 %v802
        %v873 = vunpack.c.l.b16 %v803
        %v874 = vunpack.c.l.b16 %v804
        %v875 = vunpack.c.l.b16 %v805
        %v876 = vunpack.c.l.b16 %v806
        %v877 = vunpack.c.l.b16 %v807
        %v878 = vunpack.c.l.b16 %v808
        %v879 = vunpack.c.l.b16 %v809
        %v880 = vunpack.c.l.b16 %v810
        %v881 = vunpack.c.l.b16 %v811
        %v882 = vunpack.c.l.b16 %v812
        %v883 = vunpack.c.l.b16 %v813
        %v884 = vpack.c.b16 %v853, %v852
        %v885 = vpack.c.b16 %v855, %v854
        %v886 = vpack.c.b16 %v857, %v856
        %v887 = vpack.c.b16 %v859, %v858
        %v888 = vpack.c.b16 %v861, %v860
        %v889 = vpack.c.b16 %v863, %v862
        %v890 = vpack.c.b16 %v865, %v864
        %v891 = vpack.c.b16 %v867, %v866
        %v892 = vpack.c.b16 %v869, %v868
        %v893 = vpack.c.b16 %v871, %v870
        %v894 = vpack.c.b16 %v873, %v872
        %v895 = vpack.c.b16 %v875, %v874
        %v896 = vpack.c.b16 %v877, %v876
        %v897 = vpack.c.b16 %v879, %v878
        %v898 = vpack.c.b16 %v881, %v880
        %v899 = vpack.c.b16 %v883, %v882
        %916 = vmatprep.subr.bf16.mxu0 0
        %917 = vmatpush1.bf16.msra.mxu0 %v891
        %918 = vmatprep.subr.bf16.mxu0 0
        %919 = vmatpush1.bf16.msra.mxu0 %v890
        %920 = vmatprep.subr.bf16.mxu0 0
        %921 = vmatpush1.bf16.msra.mxu0 %v889
        %922 = vmatprep.subr.bf16.mxu0 0
        %923 = vmatpush1.bf16.msra.mxu0 %v888
        %924 = vmatprep.subr.bf16.mxu0 0
        %925 = vmatpush1.bf16.msra.mxu0 %v887
        %926 = vmatprep.subr.bf16.mxu0 0
        %927 = vmatpush1.bf16.msra.mxu0 %v886
        %928 = vmatprep.subr.bf16.mxu0 0
        %929 = vmatpush1.bf16.msra.mxu0 %v885
        %930 = vmatprep.subr.bf16.mxu0 0
        %931 = vmatpush1.bf16.msra.mxu0 %v884
        %932 = vmatprep.subr.bf16.mxu0 0
        %933 = vmatpush2.bf16.msra.mxu0 %v899
        %934 = vmatprep.subr.bf16.mxu0 0
        %935 = vmatpush2.bf16.msra.mxu0 %v898
        %936 = vmatprep.subr.bf16.mxu0 0
        %937 = vmatpush2.bf16.msra.mxu0 %v897
        %938 = vmatprep.subr.bf16.mxu0 0
        %939 = vmatpush2.bf16.msra.mxu0 %v896
        %940 = vmatprep.subr.bf16.mxu0 0
        %941 = vmatpush2.bf16.msra.mxu0 %v895
        %942 = vmatprep.subr.bf16.mxu0 0
        %943 = vmatpush2.bf16.msra.mxu0 %v894
        %944 = vmatprep.subr.bf16.mxu0 0
        %945 = vmatpush2.bf16.msra.mxu0 %v893
        %946 = vmatprep.subr.bf16.mxu0 0
        %947 = vmatpush2.bf16.msra.mxu0 %v892
        %948 = vmatprep.mubr.bf16.mxu0 %v773
        %949 = vmatmul.mubr.bf16.gmra.mxu0 %v772
        %v950 = vpop.f32.mrf.mxu0
        %v951 = vadd.f32 %v818, %v950
        %v952 = vpop.f32.mrf.mxu0
        %v953 = vpop.f32.mrf.mxu0
        %v954 = vadd.f32 %v818, %v953
        %v955 = vpop.f32.mrf.mxu0
        %956 = vmatprep.mubr.bf16.mxu0 %v775
        %957 = vmatmul.mubr.bf16.gmra.mxu0 %v774
        %v958 = vpop.f32.mrf.mxu0
        %v959 = vadd.f32 %v818, %v958
        %v960 = vpop.f32.mrf.mxu0
        %v961 = vpop.f32.mrf.mxu0
        %v962 = vadd.f32 %v818, %v961
        %v963 = vpop.f32.mrf.mxu0
        %964 = vmatprep.mubr.bf16.mxu0 %v777
        %965 = vmatmul.mubr.bf16.gmra.mxu0 %v776
        %v966 = vpop.f32.mrf.mxu0
        %v967 = vadd.f32 %v818, %v966
        %v968 = vpop.f32.mrf.mxu0
        %v969 = vpop.f32.mrf.mxu0
        %v970 = vadd.f32 %v818, %v969
        %v971 = vpop.f32.mrf.mxu0
        %972 = vmatprep.mubr.bf16.mxu0 %v779
        %973 = vmatmul.mubr.bf16.gmra.mxu0 %v778
        %v974 = vpop.f32.mrf.mxu0
        %v975 = vadd.f32 %v818, %v974
        %v976 = vpop.f32.mrf.mxu0
        %v977 = vpop.f32.mrf.mxu0
        %v978 = vadd.f32 %v818, %v977
        %v979 = vpop.f32.mrf.mxu0
        %980 = vmatprep.mubr.bf16.mxu0 %v781
        %981 = vmatmul.mubr.bf16.gmra.mxu0 %v780
        %v982 = vpop.f32.mrf.mxu0
        %v983 = vadd.f32 %v818, %v982
        %v984 = vpop.f32.mrf.mxu0
        %v985 = vpop.f32.mrf.mxu0
        %v986 = vpop.f32.mrf.mxu0
        %987 = vdwg.mxu0
        %v988 = vadd.f32 %v951, %v350
        %v989 = vadd.f32 %v954, %v351
        %v990 = vadd.f32 %v959, %v352
        %v991 = vadd.f32 %v962, %v353
        %v992 = vadd.f32 %v967, %v354
        %v993 = vadd.f32 %v970, %v355
        %v994 = vadd.f32 %v975, %v356
        %v995 = vadd.f32 %v978, %v357
        %v996 = vadd.f32 %v983, %v358
        %997 = vst [vmem:[%s338] sm:$0xff] %v988
        %998 = vst [vmem:[%s338 + $0x8] sm:$0xff] %v989
        %999 = vst [vmem:[%s338 + $0x10] sm:$0xff] %v990
        %1000 = vst [vmem:[%s338 + $0x18] sm:$0xff] %v991
        %1001 = vst [vmem:[%s338 + $0x20] sm:$0xff] %v992
        %1002 = vst [vmem:[%s338 + $0x28] sm:$0xff] %v993
        %1003 = vst [vmem:[%s338 + $0x30] sm:$0xff] %v994
        %1004 = vst [vmem:[%s338 + $0x38] sm:$0xff] %v995
        %1005 = vst [vmem:[%s338 + $0x40] sm:$0xff] %v996
        %s1006 = sand.u32 %s186, 1
        %s1007 = scalar_lea.sflag [#allocation4], %s1006
        %s1008 = sand.u32 %s186, 1
        %s1009 = smul.addr %s1008, 72
        %s1010 = scalar_lea.vmem [#allocation10], %s1009
        // Predicated region
        $region65: #{tpu_custom_call.1} parent=47 // pred_check
          %p1011 = pneg %p196
        $region66: #{tpu_custom_call.1} parent=47 // pred_check_branch
          %1013 = sbr.rel (%p1011) target = $region68
        $region67: #{tpu_custom_call.1} parent=47 // pred_region
          %s1014 = smul.u32 9, %s26
          %s1016 = ssub.s32 1152, 1152
          %1017 = vsyncadd %s1007, %s1016
          %s1018 = smul.addr %s1014, 128
          %s1019 = scalar_lea.hbm %s7, %s1018
          %s1020 = sshll.u32 %s1010, 4
          %s1021 = int_to_ptr.vmem [resolvable:$true] %s1020
          %1026 = dma.vmem_to_hbm [thread:$0]  %s1021, 1152, %s1019, %s1007, 128, 128, 8
        $region68: #{tpu_custom_call.1} parent=47 // pred_fallthru
          _
      $region48: #{tpu_custom_call.1} parent=5 // pred_fallthru
        _
      %p1027 = scmp.le.s32.totalorder 2, %s21
      // Predicated region
      $region69: #{tpu_custom_call.1} parent=5 // pred_check
        %p1028 = pneg %p1027
      $region70: #{tpu_custom_call.1} parent=5 // pred_check_branch
        %1030 = sbr.rel (%p1028) target = $region72
      $region71: #{tpu_custom_call.1} parent=5 // pred_region
        %s1031 = ssub.s32 %s21, 2
        // Predicated region
        $region73: #{tpu_custom_call.1} parent=71 // pred_check
          %p1032 = pneg %p202
        $region74: #{tpu_custom_call.1} parent=71 // pred_check_branch
          %1034 = sbr.rel (%p1032) target = $region76
        $region75: #{tpu_custom_call.1} parent=71 // pred_region
          %s1035 = sand.u32 %s187, 1
          %s1036 = scalar_lea.sflag [#allocation4], %s1035
          %s1037 = sand.u32 %s187, 1
          %s1038 = smul.addr %s1037, 72
          %s1039 = scalar_lea.vmem [#allocation10], %s1038
          %1040 = dma.done %s1036, 1152
        $region76: #{tpu_custom_call.1} parent=71 // pred_fallthru
          _
      $region72: #{tpu_custom_call.1} parent=5 // pred_fallthru
        _
    $region6: #{tpu_custom_call.1} parent=1 // loop_footer
      %s25 = sadd.s32 1, %s21
    $region7: #{tpu_custom_call.1} parent=1 // loop_footer_branch
      %20 = sbr.rel target = $region3
    $region8: #{tpu_custom_call.1} parent=1 // loop_exit
      _
    %1041 = vsyncpa [#allocation3], 1
    %s1042 = scalar_lea.sflag [#allocation3], 1
    %1043 = vsyncpa %s1042, 1
    %1044 = vsyncpa [#allocation6], 1
    %1045 = vsyncpa [#allocation9], 1
    %1046 = vsyncpa [#allocation4], 1
    %s1047 = scalar_lea.sflag [#allocation4], 1
    %1048 = vsyncpa %s1047, 1

</llo_original>
